<compile_context>
chip_gen: v7x
topology: tpu7x:2x2x1
jax: 0.10.0
libtpu: 0.0.40
codegen_flags: <defaults>
</compile_context>

<pallas_src>
import functools

import jax
import jax.numpy as jnp
import numpy as np
from jax.experimental import pallas as pl
from jax.experimental.pallas import tpu as pltpu


def _round_down(x, m):
    return (x // m) * m


def _sublane(*dtypes):
    # minimum sublane multiple for packed dtypes (f32: 8, bf16: 16, int8/fp8: 32)
    return max({4: 8, 2: 16, 1: 32}.get(jnp.dtype(d).itemsize, 8) for d in dtypes)


def _hw_config():
    """Return (num_tensorcores, max_bytes_per_input_block, vmem_limit_bytes)."""
    vmem = 128 << 20
    cores = None
    try:
        info = pltpu.get_tpu_info()
        vmem = int(getattr(info, "vmem_capacity_bytes", vmem))
        for name in ("num_cores", "core_count", "num_tensorcores",
                     "tensorcore_count"):
            v = getattr(info, name, None)
            if isinstance(v, (int, np.integer)) and int(v) > 0:
                cores = int(v)
                break
    except Exception:
        pass
    if vmem <= (64 << 20):                       # v7x-class: 64 MiB VMEM per TC
        return (cores or 2), 4 << 20, 32 << 20
    return (cores or 1), 8 << 20, 64 << 20       # v5e / v6e: 128 MiB VMEM, 1 TC


# ------------------------- per-block contributions -------------------------

def _gaussian_contrib(r, t):
    d = r - t
    return d * d


def _logistic_contrib(z, t):
    # BCE(sigmoid(z), t) == softplus(z) - t*z   (numerically stable)
    return jnp.maximum(z, 0.0) + jnp.log1p(jnp.exp(-jnp.abs(z))) - t * z


def _multinomial_contrib(r, t):
    # log_softmax over the (full) feature axis times the targets
    m = jnp.max(r, axis=-1, keepdims=True)
    lse = m + jnp.log(jnp.sum(jnp.exp(r - m), axis=-1, keepdims=True))
    return (r - lse) * t


# ------------------------- kernels -------------------------

def _accumulate(a_ref, b_ref, acc_ref, *, contrib, tb, acc_rows, valid_rows,
                needs_mask):
    i = pl.program_id(1)

    @pl.when(i == 0)
    def _init():
        acc_ref[...] = jnp.zeros_like(acc_ref)

    c = contrib(a_ref[...].astype(jnp.float32), b_ref[...].astype(jnp.float32))
    if needs_mask:
        row0 = (pl.program_id(0) * pl.num_programs(1) + i) * tb
        rows = row0 + jax.lax.broadcasted_iota(jnp.int32, (tb, 1), 0)
        # jnp.where makes padding contribute exactly 0, even for NaN/Inf garbage
        c = jnp.where(rows < valid_rows, c, 0.0)
    # Fold over the leading axis into a small fixed (acc_rows, D) accumulator:
    # pure VALU vreg adds, acc RMW cost independent of the block size.
    acc_ref[...] += c.reshape(-1, acc_rows, c.shape[-1]).sum(axis=0)


def _loss_kernel(a_ref, b_ref, out_ref, acc_ref, *, contrib, scale,
                 valid_rows, tb, acc_rows, needs_mask):
    _accumulate(a_ref, b_ref, acc_ref, contrib=contrib, tb=tb,
                acc_rows=acc_rows, valid_rows=valid_rows, needs_mask=needs_mask)

    @pl.when(pl.program_id(1) == pl.num_programs(1) - 1)
    def _fin():
        out_ref[0, 0] = jnp.sum(acc_ref[...]) * scale


def _loss_kld_kernel(a_ref, b_ref, mu_ref, lv_ref, loss_ref, kld_ref, acc_ref,
                     *, contrib, scale, kld_scale, valid_rows, tb, acc_rows,
                     needs_mask):
    # Fused VAE path: main loss over the tiled stream + KLD over the small
    # resident mu/logvar blocks, computed once at the final grid step.
    _accumulate(a_ref, b_ref, acc_ref, contrib=contrib, tb=tb,
                acc_rows=acc_rows, valid_rows=valid_rows, needs_mask=needs_mask)

    @pl.when(pl.program_id(1) == pl.num_programs(1) - 1)
    def _fin():
        loss_ref[0, 0] = jnp.sum(acc_ref[...]) * scale
        mu = mu_ref[...].astype(jnp.float32)
        lv = lv_ref[...].astype(jnp.float32)
        # Each split writes the full KLD pre-scaled by 1/nsplit; wrapper sums.
        kld_ref[0, 0] = jnp.sum(1.0 + lv - mu * mu - jnp.exp(lv)) * kld_scale


# ------------------------- pallas_call wrapper -------------------------

def _run_loss(contrib, scale, a, b, mu=None, logvar=None, kld_per_row=None,
              max_block_bytes=None):
    assert a.ndim == 2 and a.shape == b.shape
    B, D = a.shape
    num_tc, blk_bytes, vmem_limit = _hw_config()
    if max_block_bytes is not None:
        blk_bytes = max_block_bytes

    sub = _sublane(a.dtype, b.dtype)
    max_item = max(jnp.dtype(a.dtype).itemsize, jnp.dtype(b.dtype).itemsize)
    tb_cap = max(sub, _round_down(blk_bytes // max(D * max_item, 1), sub))
    # TODO(synk): if D is so wide that even `sub` rows exceed the VMEM budget,
    # the feature axis itself would need tiling (two-pass softmax for
    # Multinomial); not needed for realistic AE shapes.
    tb = B if B <= tb_cap else tb_cap

    n_tiles_total = pl.cdiv(B, tb)
    nsplit = 2 if (num_tc >= 2 and n_tiles_total >= 2) else 1
    n_tiles = pl.cdiv(n_tiles_total, nsplit)
    needs_mask = nsplit * n_tiles * tb > B
    acc_rows = 8 if tb % 8 == 0 else tb

    if nsplit * n_tiles > n_tiles_total:
        # Overshoot tiles re-read the last real block (in-bounds DMA); the
        # in-kernel row mask zeroes their contribution.
        in_map = lambda s, i: (jnp.minimum(s * n_tiles + i, n_tiles_total - 1), 0)
    else:
        in_map = lambda s, i: (s * n_tiles + i, 0)

    tiled_spec = pl.BlockSpec((tb, D), in_map)
    smem_out = pl.BlockSpec((1, 1), lambda s, i: (s, 0),
                            memory_space=pltpu.MemorySpace.SMEM)
    cparams = pltpu.CompilerParams(
        dimension_semantics=("parallel", "arbitrary"),
        vmem_limit_bytes=vmem_limit)
    scratch = [pltpu.VMEM((acc_rows, D), jnp.float32)]
    common = dict(contrib=contrib, scale=scale, valid_rows=B, tb=tb,
                  acc_rows=acc_rows, needs_mask=needs_mask)

    if mu is None:
        out = pl.pallas_call(
            functools.partial(_loss_kernel, **common),
            out_shape=jax.ShapeDtypeStruct((nsplit, 1), jnp.float32),
            grid_spec=pltpu.PrefetchScalarGridSpec(
                num_scalar_prefetch=0,
                grid=(nsplit, n_tiles),
                in_specs=[tiled_spec, tiled_spec],
                out_specs=smem_out,
                scratch_shapes=scratch),
            compiler_params=cparams,
        )(a, b)
        return jnp.sum(out), None

    loss_p, kld_p = pl.pallas_call(
        functools.partial(_loss_kld_kernel, kld_scale=kld_per_row / nsplit,
                          **common),
        out_shape=(jax.ShapeDtypeStruct((nsplit, 1), jnp.float32),
                   jax.ShapeDtypeStruct((nsplit, 1), jnp.float32)),
        grid_spec=pltpu.PrefetchScalarGridSpec(
            num_scalar_prefetch=0,
            grid=(nsplit, n_tiles),
            in_specs=[tiled_spec, tiled_spec,
                      pl.BlockSpec(mu.shape, lambda s, i: (0, 0)),
                      pl.BlockSpec(logvar.shape, lambda s, i: (0, 0))],
            out_specs=(smem_out, smem_out),
            scratch_shapes=scratch),
        compiler_params=cparams,
    )(a, b, mu, logvar)
    return jnp.sum(loss_p), jnp.sum(kld_p)


# ------------------------- module equivalent -------------------------

class LossFunc:
    """JAX/Pallas port of Multi_AE_utils.LossFunc (forward only)."""

    def __init__(self, loss_type='Multinomial', model_type=None,
                 max_block_bytes=None):
        self.loss_type = loss_type
        self.model_type = model_type
        self._max_block_bytes = max_block_bytes   # test / tuning hook only

    def __call__(self, recon_x=None, x=None, mu=None, logvar=None, anneal=None):
        if self.loss_type == 'Gaussian':
            # mean over all elements; flatten trailing dims (mean is invariant)
            r2 = recon_x.reshape(recon_x.shape[0], -1)
            x2 = x.reshape(r2.shape)
            contrib, scale = _gaussian_contrib, 1.0 / r2.size
        elif self.loss_type == 'Logistic':
            # BCE(sigmoid(recon_x), x).sum(1).mean() == total_sum / B
            r2, x2 = recon_x, x
            contrib, scale = _logistic_contrib, 1.0 / recon_x.shape[0]
        elif self.loss_type == 'Multinomial':
            # -mean_b( sum_d log_softmax(recon_x)[b,d] * x[b,d] )
            r2, x2 = recon_x, x
            contrib, scale = _multinomial_contrib, -1.0 / recon_x.shape[0]
        else:
            raise Exception('Not correct loss_type!')

        if self.model_type == 'VAE':
            loss, kld = _run_loss(contrib, scale, r2, x2, mu=mu, logvar=logvar,
                                  kld_per_row=-0.5 / mu.shape[0],
                                  max_block_bytes=self._max_block_bytes)
            return loss + anneal * kld
        loss, _ = _run_loss(contrib, scale, r2, x2,
                            max_block_bytes=self._max_block_bytes)
        return loss


# ------------------------- demo / correctness -------------------------

if __name__ == "__main__":
    key = jax.random.PRNGKey(0)
    k1, k2, k3, k4, k5, k6 = jax.random.split(key, 6)
    B, D, Z = 16, 32, 8
    recon_x = jax.random.normal(k1, (B, D), dtype=jnp.float32)
    x = jax.random.uniform(k2, (B, D), dtype=jnp.float32)
    mu = jax.random.normal(k3, (B, Z), dtype=jnp.float32)
    logvar = 0.1 * jax.random.normal(k4, (B, Z), dtype=jnp.float32)
    anneal = 0.2

    # plain-JAX references (mirror the PyTorch math)
    def ref_multinomial(r, t):
        return -jnp.mean(jnp.sum(jax.nn.log_softmax(r, axis=1) * t, axis=-1))

    def ref_gaussian(r, t):
        return jnp.mean((r - t) ** 2)

    def ref_logistic(r, t):
        p = jax.nn.sigmoid(r)
        bce = -(t * jnp.log(p) + (1.0 - t) * jnp.log1p(-p))
        return jnp.mean(jnp.sum(bce, axis=1))

    def ref_kld(m, lv):
        return -0.5 * jnp.mean(jnp.sum(1.0 + lv - m ** 2 - jnp.exp(lv), axis=1))

    loss_multi = LossFunc('Multinomial')(recon_x=recon_x, x=x)
    loss_gauss = LossFunc('Gaussian')(recon_x=recon_x, x=x)
    loss_logit = LossFunc('Logistic')(recon_x=recon_x, x=x)
    loss_vae_m = LossFunc('Multinomial', 'VAE')(
        recon_x=recon_x, x=x, mu=mu, logvar=logvar, anneal=anneal)
    loss_vae_l = LossFunc('Logistic', 'VAE')(
        recon_x=recon_x, x=x, mu=mu, logvar=logvar, anneal=anneal)

    # Ragged / multi-tile path: force tiny blocks so tb < B and the in-kernel
    # row mask (and clamped split indexing on 2-TC parts) are exercised.
    Bb, Dd = 100, 64
    rb = jax.random.normal(k5, (Bb, Dd), dtype=jnp.float32)
    xb = jax.random.uniform(k6, (Bb, Dd), dtype=jnp.float32)
    small = 16 * Dd * 4          # 16 rows per input block
    loss_multi_t = LossFunc('Multinomial', max_block_bytes=small)(recon_x=rb, x=xb)
    loss_gauss_t = LossFunc('Gaussian', max_block_bytes=small)(recon_x=rb, x=xb)

    jax.block_until_ready((loss_multi, loss_gauss, loss_logit, loss_vae_m,
                           loss_vae_l, loss_multi_t, loss_gauss_t))

    np.testing.assert_allclose(np.asarray(loss_multi),
                               np.asarray(ref_multinomial(recon_x, x)),
                               rtol=1e-5, atol=1e-5)
    np.testing.assert_allclose(np.asarray(loss_gauss),
                               np.asarray(ref_gaussian(recon_x, x)),
                               rtol=1e-5, atol=1e-5)
    np.testing.assert_allclose(np.asarray(loss_logit),
                               np.asarray(ref_logistic(recon_x, x)),
                               rtol=1e-5, atol=1e-5)
    ref_vae_m = ref_multinomial(recon_x, x) + anneal * ref_kld(mu, logvar)
    ref_vae_l = ref_logistic(recon_x, x) + anneal * ref_kld(mu, logvar)
    np.testing.assert_allclose(np.asarray(loss_vae_m), np.asarray(ref_vae_m),
                               rtol=1e-5, atol=1e-5)
    np.testing.assert_allclose(np.asarray(loss_vae_l), np.asarray(ref_vae_l),
                               rtol=1e-5, atol=1e-5)
    np.testing.assert_allclose(np.asarray(loss_multi_t),
                               np.asarray(ref_multinomial(rb, xb)),
                               rtol=1e-4, atol=1e-4)
    np.testing.assert_allclose(np.asarray(loss_gauss_t),
                               np.asarray(ref_gaussian(rb, xb)),
                               rtol=1e-4, atol=1e-4)

    print("KERNEL_OK")
</pallas_src>

<mosaic_0001>
module attributes {stable_mosaic.version = 11 : i64} {
  func.func @_loss_kernel(%arg0: i32, %arg1: i32, %arg2: memref<16x32xf32, #tpu.memory_space<vmem>>, %arg3: memref<16x32xf32, #tpu.memory_space<vmem>>, %arg4: memref<1x1xf32, #tpu.memory_space<smem>>, %arg5: memref<8x32xf32, #tpu.memory_space<vmem>>) attributes {dimension_semantics = [#tpu.dimension_semantics<parallel>, #tpu.dimension_semantics<arbitrary>], iteration_bounds = array<i64: 1, 1>, scalar_prefetch = 0 : i64, scratch_operands = 1 : i64, tpu.core_type = #tpu.core_type<tc>, window_params = [{transform_indices = @transform_0, window_bounds = array<i64: 16, 32>}, {transform_indices = @transform_1, window_bounds = array<i64: 16, 32>}, {transform_indices = @transform_2, window_bounds = array<i64: 1, 1>}]} {
    %c0_i32 = arith.constant 0 : i32
    %0 = arith.cmpi eq, %arg1, %c0_i32 : i32
    %1 = arith.extui %0 : i1 to i32
    %c0_i32_0 = arith.constant 0 : i32
    %2 = arith.cmpi ne, %1, %c0_i32_0 : i32
    scf.if %2 {
      %cst_12 = arith.constant 0.000000e+00 : f32
      %25 = vector.broadcast %cst_12 : f32 to vector<8x32xf32>
      %c0_13 = arith.constant 0 : index
      %c0_14 = arith.constant 0 : index
      %26 = vector.load %arg5[%c0_13, %c0_14] : memref<8x32xf32, #tpu.memory_space<vmem>>, vector<8x32xf32>
      tpu.vector_store %arg5[%c0_13, %c0_14], %25 {strides = array<i32>} : memref<8x32xf32, #tpu.memory_space<vmem>>, vector<8x32xf32>,
    } else {
    }
    %c0 = arith.constant 0 : index
    %c0_1 = arith.constant 0 : index
    %3 = vector.load %arg2[%c0, %c0_1] : memref<16x32xf32, #tpu.memory_space<vmem>>, vector<16x32xf32>
    %c0_2 = arith.constant 0 : index
    %c0_3 = arith.constant 0 : index
    %4 = vector.load %arg3[%c0_2, %c0_3] : memref<16x32xf32, #tpu.memory_space<vmem>>, vector<16x32xf32>
    %cst = arith.constant dense<0xFF800000> : vector<16xf32>
    %5 = vector.multi_reduction <maximumf>, %3, %cst [1] : vector<16x32xf32> to vector<16xf32>
    %6 = vector.shape_cast %5 : vector<16xf32> to vector<16x1xf32>
    %7 = vector.broadcast %6 : vector<16x1xf32> to vector<16x32xf32>
    %8 = arith.subf %3, %7 : vector<16x32xf32>
    %9 = math.exp %8 : vector<16x32xf32>
    %cst_4 = arith.constant dense<0.000000e+00> : vector<16xf32>
    %10 = vector.multi_reduction <add>, %9, %cst_4 [1] : vector<16x32xf32> to vector<16xf32>
    %11 = vector.shape_cast %10 : vector<16xf32> to vector<16x1xf32>
    %12 = math.log %11 : vector<16x1xf32>
    %13 = arith.addf %6, %12 : vector<16x1xf32>
    %14 = vector.broadcast %13 : vector<16x1xf32> to vector<16x32xf32>
    %15 = arith.subf %3, %14 : vector<16x32xf32>
    %16 = arith.mulf %15, %4 : vector<16x32xf32>
    %c0_5 = arith.constant 0 : index
    %c0_6 = arith.constant 0 : index
    %17 = vector.load %arg5[%c0_5, %c0_6] : memref<8x32xf32, #tpu.memory_space<vmem>>, vector<8x32xf32>
    %18 = vector.shape_cast %16 : vector<16x32xf32> to vector<2x8x32xf32>
    %cst_7 = arith.constant dense<0.000000e+00> : vector<8x32xf32>
    %19 = vector.multi_reduction <add>, %18, %cst_7 [0] : vector<2x8x32xf32> to vector<8x32xf32>
    %20 = arith.addf %17, %19 : vector<8x32xf32>
    %c0_8 = arith.constant 0 : index
    %c0_9 = arith.constant 0 : index
    %21 = vector.load %arg5[%c0_8, %c0_9] : memref<8x32xf32, #tpu.memory_space<vmem>>, vector<8x32xf32>
    tpu.vector_store %arg5[%c0_8, %c0_9], %20 {strides = array<i32>} : memref<8x32xf32, #tpu.memory_space<vmem>>, vector<8x32xf32>,
    %c0_i32_10 = arith.constant 0 : i32
    %22 = arith.cmpi eq, %arg1, %c0_i32_10 : i32
    %23 = arith.extui %22 : i1 to i32
    %c0_i32_11 = arith.constant 0 : i32
    %24 = arith.cmpi ne, %23, %c0_i32_11 : i32
    scf.if %24 {
      %c0_12 = arith.constant 0 : index
      %c0_13 = arith.constant 0 : index
      %25 = vector.load %arg5[%c0_12, %c0_13] : memref<8x32xf32, #tpu.memory_space<vmem>>, vector<8x32xf32>
      %26 = vector.shape_cast %25 : vector<8x32xf32> to vector<1x8x32xf32>
      %cst_14 = arith.constant dense<0.000000e+00> : vector<1xf32>
      %27 = vector.multi_reduction <add>, %26, %cst_14 [1, 2] : vector<1x8x32xf32> to vector<1xf32>
      %28 = vector.shape_cast %27 : vector<1xf32> to vector<1x1x1xf32>
      %29 = vector.extract %28[0, 0, 0] : f32 from vector<1x1x1xf32>
      %cst_15 = arith.constant -6.250000e-02 : f32
      %30 = arith.mulf %29, %cst_15 : f32
      %c0_16 = arith.constant 0 : index
      %c0_17 = arith.constant 0 : index
      %31 = memref.load %arg4[%c0_16, %c0_17] : memref<1x1xf32, #tpu.memory_space<smem>>
      memref.store %30, %arg4[%c0_16, %c0_17] : memref<1x1xf32, #tpu.memory_space<smem>>
    } else {
    }
    return
  }
  func.func @transform_0(%arg0: i32, %arg1: i32) -> (i32, i32) {
    %c1_i32 = arith.constant 1 : i32
    %0 = arith.muli %arg0, %c1_i32 : i32
    %1 = arith.addi %0, %arg1 : i32
    %c0_i32 = arith.constant 0 : i32
    %c0_i32_0 = arith.constant 0 : i32
    return %1, %c0_i32 : i32, i32
  }
  func.func @transform_1(%arg0: i32, %arg1: i32) -> (i32, i32) {
    %c1_i32 = arith.constant 1 : i32
    %0 = arith.muli %arg0, %c1_i32 : i32
    %1 = arith.addi %0, %arg1 : i32
    %c0_i32 = arith.constant 0 : i32
    %c0_i32_0 = arith.constant 0 : i32
    return %1, %c0_i32 : i32, i32
  }
  func.func @transform_2(%arg0: i32, %arg1: i32) -> (i32, i32) {
    %c0_i32 = arith.constant 0 : i32
    %c0_i32_0 = arith.constant 0 : i32
    return %arg0, %c0_i32 : i32, i32
  }
}

</mosaic_0001>

<llo_original>
// kernel: tpu_custom_call.1
$region0: #{tpu_custom_call.1}
  #allocation0 [shape = 'u32[]', space=smem, size = 0x4, offset = 0x4, fixed_abs, tag = 'smem constant byte address 0x4 - core index']
  #allocation1 [shape = 'u32[144,128]{1,0:T(1,128)}', space=vmem, size = 0x12000, scoped, tag = 'internal scratch']
  #allocation2 [shape = 'f32[8,32]{1,0:T(8,128)}', space=vmem, size = 0x1000, scoped, tag = 'scratch operand']
  %s0 = inlined_call_operand.hbm [shape: f32[16,32], index: 0, kind: input, shape index: {}]
  %s1 = inlined_call_operand.hbm [shape: f32[16,32], index: 1, kind: input, shape index: {}]
  %s2 = inlined_call_operand.hbm [shape: f32[1,1], index: 2, kind: output, shape index: {}]
  %s3 = sld [smem:[#allocation0]]
  $region34: #{tpu_custom_call.1} parent=0
    _
  %s5 = ssub.s32 1, %s3
  %s6 = scalar_select 0, %s5, %s3
  $region1: #{tpu_custom_call.1} parent=0
    #allocation3 [shape = 'u8[8192]{0}', space=vmem, size = 0x2000, scoped, tag = 'input window, operand 0, single buffered']
    #allocation4 [shape = 's32[1]{0}', space=sflag, size = 0x4, scoped, tag = 'scoped memory for tpu_custom_call.1']
    #allocation5 [shape = 's32[1]{0}', space=sflag, size = 0x4, scoped, tag = 'scoped memory for tpu_custom_call.1']
    #allocation6 [shape = 'u8[8192]{0}', space=vmem, size = 0x2000, scoped, tag = 'input window, operand 1, single buffered']
    #allocation7 [shape = 's32[1]{0}', space=sflag, size = 0x4, scoped, tag = 'scoped memory for tpu_custom_call.1']
    #allocation8 [shape = 'u8[512]{0}', space=smem, size = 0x200, scoped, tag = 'output window, operand 0, single buffered']
    %7 = vsyncpa [#allocation4], 0
    %8 = vsyncpa [#allocation7], 0
    %9 = vsyncpa [#allocation5], 0
    // Predicated region
    $region2: #{tpu_custom_call.1} parent=1 // pred_check
      _
    $region3: #{tpu_custom_call.1} parent=1 // pred_check_branch
      %11 = sbr.rel (0) target = $region5
    $region4: #{tpu_custom_call.1} parent=1 // pred_region
      %s12 = sadd.s32 0, 0
      %s13 = smul.u32 2, %s12
      %s15 = ssub.s32 256, 256
      %16 = vsyncadd [#allocation4], %s15
      %s17 = smul.addr %s13, 128
      %s18 = scalar_lea.hbm %s0, %s17
      %s19 = sshll.u32 [#allocation3], 4
      %s20 = int_to_ptr.vmem [resolvable:$true] %s19
      %25 = dma.hbm_to_vmem [thread:$0]  %s18, 256, %s20, [#allocation4], 128, 128, 8
    $region5: #{tpu_custom_call.1} parent=1 // pred_fallthru
      _
    // Predicated region
    $region6: #{tpu_custom_call.1} parent=1 // pred_check
      _
    $region7: #{tpu_custom_call.1} parent=1 // pred_check_branch
      %27 = sbr.rel (0) target = $region9
    $region8: #{tpu_custom_call.1} parent=1 // pred_region
      %s28 = sadd.s32 0, 0
      %s29 = smul.u32 2, %s28
      %s31 = ssub.s32 256, 256
      %32 = vsyncadd [#allocation7], %s31
      %s33 = smul.addr %s29, 128
      %s34 = scalar_lea.hbm %s1, %s33
      %s35 = sshll.u32 [#allocation6], 4
      %s36 = int_to_ptr.vmem [resolvable:$true] %s35
      %41 = dma.hbm_to_vmem [thread:$0]  %s34, 256, %s36, [#allocation7], 128, 128, 8
    $region9: #{tpu_custom_call.1} parent=1 // pred_fallthru
      _
    // Predicated region
    $region10: #{tpu_custom_call.1} parent=1 // pred_check
      _
    $region11: #{tpu_custom_call.1} parent=1 // pred_check_branch
      %43 = sbr.rel (0) target = $region13
    $region12: #{tpu_custom_call.1} parent=1 // pred_region
      %44 = dma.done [#allocation4], 256
    $region13: #{tpu_custom_call.1} parent=1 // pred_fallthru
      _
    // Predicated region
    $region14: #{tpu_custom_call.1} parent=1 // pred_check
      _
    $region15: #{tpu_custom_call.1} parent=1 // pred_check_branch
      %46 = sbr.rel (0) target = $region17
    $region16: #{tpu_custom_call.1} parent=1 // pred_region
      %47 = dma.done [#allocation7], 256
    $region17: #{tpu_custom_call.1} parent=1 // pred_fallthru
      _
    %s48 = sadd.s32 0, 0
    %s49 = smul.u32 2, %s48
    %s50 = sadd.s32 0, 0
    %s51 = smul.u32 2, %s50
    %p52 = scmp.eq.s32.totalorder 0, 0
    // Predicated region
    $region18: #{tpu_custom_call.1} parent=1 // pred_check
      %p53 = pneg %p52
    $region19: #{tpu_custom_call.1} parent=1 // pred_check_branch
      %55 = sbr.rel (%p53) target = $region21
    $region20: #{tpu_custom_call.1} parent=1 // pred_region
      %vm56 = vcmask 261120
      %57 = vst.msk [vmem:[#allocation2] sm:$0xff] %vm56, 0.0
    $region21: #{tpu_custom_call.1} parent=1 // pred_fallthru
      _
    %v58 = vld [vmem:[#allocation3] sm:$0xff]
    %v59 = vld [vmem:[#allocation3 + $0x8] sm:$0xff]
    %v60 = vld [vmem:[#allocation6] sm:$0xff]
    %v61 = vld [vmem:[#allocation6 + $0x8] sm:$0xff]
    %vm62 = vcmask 261120
    %v63 = vsel %vm62, %v58, -inf
    %64 = vmax.xlane.f32.xlu0 %v63
    %v65 = vpop.xlane.xlu0 %64
    %v66 = vsel %vm62, %v59, -inf
    %67 = vmax.xlane.f32.xlu0 %v66
    %v68 = vpop.xlane.xlu0 %67
    %v69 = vsub.f32 %v58, %v65
    %v70 = vsub.f32 %v59, %v68
    %v71 = vmul.f32 %v69, 1.442695
    %v72 = vpow.pop %v71
    %v73 = vmul.f32 %v70, 1.442695
    %v74 = vpow.pop %v73
    %v75 = vsel %vm62, %v72, 0.0
    %76 = vadd.xlane.f32.xlu0 %v75
    %v77 = vpop.xlane.xlu0 %76
    %v78 = vsel %vm62, %v74, 0.0
    %79 = vadd.xlane.f32.xlu0 %v78
    %v80 = vpop.xlane.xlu0 %79
    %v81 = vlog2.pop %v77
    %v82 = vmul.f32 %v81, 0.6931472
    %v83 = vlog2.pop %v80
    %v84 = vmul.f32 %v83, 0.6931472
    %v85 = vadd.f32 %v65, %v82
    %v86 = vadd.f32 %v68, %v84
    %v87 = vsub.f32 %v58, %v85
    %v88 = vsub.f32 %v59, %v86
    %v89 = vmul.f32 %v87, %v60
    %v90 = vmul.f32 %v88, %v61
    %v91 = vld [vmem:[#allocation2] sm:$0xff]
    %v92 = vsel %vm62, %v89, 0.0
    %v93 = vsel %vm62, %v90, 0.0
    %v94 = vadd.f32 %v92, %v93
    %v95 = vadd.f32 %v91, %v94
    %96 = vst.msk [vmem:[#allocation2] sm:$0xff] %vm62, %v95
    // Predicated region
    $region22: #{tpu_custom_call.1} parent=1 // pred_check
      %p97 = pneg %p52
    $region23: #{tpu_custom_call.1} parent=1 // pred_check_branch
      %99 = sbr.rel (%p97) target = $region25
    $region24: #{tpu_custom_call.1} parent=1 // pred_region
      %v100 = vld [vmem:[#allocation2] sm:$0xff]
      %v101 = vsel %vm62, %v100, 0.0
      %102 = vadd.xlane.f32.xlu0 %v101
      %v103 = vpop.xlane.xlu0 %102
      %v104 = vrot.slane %v103, 4
      %v105 = vadd.f32 %v103, %v104
      %v106 = vrot.slane %v105, 2
      %v107 = vadd.f32 %v105, %v106
      %v108 = vrot.slane %v107, 1
      %v109 = vadd.f32 %v107, %v108
      %s110 = vtos %v109
      %s111 = smul.f32 %s110, -0.0625
      %s112 = scalar_lea.smem [#allocation8], 0
      %113 = sst [smem:[%s112]] %s111
    $region25: #{tpu_custom_call.1} parent=1 // pred_fallthru
      _
    // Predicated region
    $region26: #{tpu_custom_call.1} parent=1 // pred_check
      _
    $region27: #{tpu_custom_call.1} parent=1 // pred_check_branch
      %115 = sbr.rel (0) target = $region29
    $region28: #{tpu_custom_call.1} parent=1 // pred_region
      %s117 = ssub.s32 16, 16
      %118 = vsyncadd [#allocation5], %s117
      %121 = dma.smem_to_hbm [#allocation8], 16, %s2, [#allocation5]
    $region29: #{tpu_custom_call.1} parent=1 // pred_fallthru
      _
    // Predicated region
    $region30: #{tpu_custom_call.1} parent=1 // pred_check
      _
    $region31: #{tpu_custom_call.1} parent=1 // pred_check_branch
      %123 = sbr.rel (0) target = $region33
    $region32: #{tpu_custom_call.1} parent=1 // pred_region
      %124 = dma.done [#allocation5], 16
    $region33: #{tpu_custom_call.1} parent=1 // pred_fallthru
      _
    %125 = sfence
    %126 = vsyncpa [#allocation4], 1
    %127 = vsyncpa [#allocation7], 1
    %128 = vsyncpa [#allocation5], 1

</llo_original>
